<compile_context>
chip_gen: v7x
topology: tpu7x:2x2x1
jax: 0.10.0
libtpu: 0.0.40
codegen_flags: <defaults>
</compile_context>

<pallas_src>
import jax
import jax.numpy as jnp
from jax.experimental import pallas as pl
from jax.experimental.pallas import tpu as pltpu


_SUBLANE = 8
MAX_TILE_P = 2048   # packed rows per grid tile (x tile ~1-2 MiB f32)
MIN_TILES = 4       # aim for >=4 grid steps => >=2 per TensorCore on v7x


def _default_pack():
    """Rows packed per lane-row: 8 (256-wide) for 256x256 MXUs (v6e/v7x),
    4 (128-wide) for 128x128 MXUs (v5e and older)."""
    try:
        kind = jax.devices()[0].device_kind.lower()
    except Exception:
        return 4
    if any(g in kind for g in ("v2", "v3", "v4", "v5")):
        return 4
    return 8


def _round_up(x, m):
    return ((x + m - 1) // m) * m


def _choose_tiling(prows):
    """Pick (packed rows per tile, n_tiles) for `prows` packed rows."""
    if prows <= MIN_TILES * _SUBLANE:
        # Tiny batch: ~0.35us/step overhead dominates -> single tile.
        return max(_SUBLANE, _round_up(prows, _SUBLANE)), 1
    tile_p = min(MAX_TILE_P, _round_up(pl.cdiv(prows, MIN_TILES), _SUBLANE))
    return tile_p, pl.cdiv(prows, tile_p)


def jppnet_kernel(x_ref, w1_ref, b1_ref, w2_ref, b2_ref, wo_ref, bo_ref, o_ref):
    cdt = x_ref.dtype  # MXU input dtype (f32, or bf16 via pack_params(mxu_dtype=...))
    # layer 1: [tile_p, pack*n_in] @ block-diag [pack*n_in, pack*h0]
    h = jnp.dot(x_ref[...], w1_ref[...], preferred_element_type=jnp.float32)
    h = jnp.maximum(h + b1_ref[...], 0.0)
    # layer 2
    h = jnp.dot(h.astype(cdt), w2_ref[...], preferred_element_type=jnp.float32)
    h = jnp.maximum(h + b2_ref[...], 0.0)
    # output layer: block-diag [pack*h1, pack] -> one scalar per packed-row slot
    # TODO(synk): if the vmatmul slot is the measured limiter, replace this
    # small matmul with a VPU multiply + 32-lane segmented reduction.
    y = jnp.dot(h.astype(cdt), wo_ref[...], preferred_element_type=jnp.float32)
    y = y + bo_ref[...]
    o_ref[...] = y.astype(o_ref.dtype)


def _block_diag(w, n):
    """Tile w (fi, fo) n times along the diagonal -> (n*fi, n*fo)."""
    fi, fo = w.shape
    eye = jnp.eye(n, dtype=w.dtype)
    big = eye[:, :, None, None] * w[None, None, :, :]      # (n, n, fi, fo)
    return big.transpose(0, 2, 1, 3).reshape(n * fi, n * fo)


def pack_params(params, *, pack=None, mxu_dtype=jnp.float32):
    """Build the block-diagonal / lane-dense weights ONCE (hoisted out of the
    per-call forward).  mxu_dtype=jnp.bfloat16 is faster (native MXU rate,
    half the x DMA bytes) but gives ~1e-3 relative error."""
    if pack is None:
        pack = _default_pack()
    w1, b1 = params["w1"], params["b1"]
    w2, b2 = params["w2"], params["b2"]
    wo, bo = params["wo"], params["bo"]
    return {
        "w1": _block_diag(w1, pack).astype(mxu_dtype),
        "b1": jnp.tile(b1, (1, pack)).astype(jnp.float32),
        "w2": _block_diag(w2, pack).astype(mxu_dtype),
        "b2": jnp.tile(b2, (1, pack)).astype(jnp.float32),
        "wo": _block_diag(wo, pack).astype(mxu_dtype),
        "bo": jnp.tile(bo, (1, pack)).astype(jnp.float32),
    }


def jppnet_forward(x, packed):
    """x: [B, n_input] f32.  packed: output of pack_params()."""
    B, n_in = x.shape
    w1p, b1p = packed["w1"], packed["b1"]
    w2p, b2p = packed["w2"], packed["b2"]
    wop, bop = packed["wo"], packed["bo"]

    kp = w1p.shape[0]              # pack * n_in  (lane width of packed x)
    pack = kp // n_in
    no = wop.shape[1]              # == pack (one scalar output per packed slot)

    # --- adaptive batch tiling (pad so stores stay unmasked) ----------------
    prows = pl.cdiv(B, pack)
    tile_p, n_tiles = _choose_tiling(prows)
    prows_pad = n_tiles * tile_p
    B_pad = prows_pad * pack

    xp = x if B_pad == B else jnp.pad(x, ((0, B_pad - B), (0, 0)))
    xp = xp.reshape(prows_pad, kp).astype(w1p.dtype)   # pack rows/lane-row, free reshape

    h1w, h2w = w1p.shape[1], w2p.shape[1]
    flops = 2 * prows_pad * (kp * h1w + h1w * h2w + h2w * no)
    bytes_accessed = (xp.size * xp.dtype.itemsize + prows_pad * no * 4
                      + sum(a.size * a.dtype.itemsize
                            for a in (w1p, b1p, w2p, b2p, wop, bop)))

    # Weights/biases: constant block index -> DMA'd once, resident in VMEM.
    # NOTE: pl.Buffered(1) on these specs would halve their (already tiny,
    # <1 MiB total) double-buffer footprint; skipped as negligible here.
    def resident(shape):
        return pl.BlockSpec(shape, lambda i: (0, 0))

    out = pl.pallas_call(
        jppnet_kernel,
        out_shape=jax.ShapeDtypeStruct((prows_pad, no), jnp.float32),
        grid_spec=pltpu.PrefetchScalarGridSpec(
            num_scalar_prefetch=0,
            grid=(n_tiles,),
            in_specs=[
                # batch tile of packed rows: DMA'd / double-buffered per step
                pl.BlockSpec((tile_p, kp), lambda i: (i, 0)),
                resident(w1p.shape), resident(b1p.shape),
                resident(w2p.shape), resident(b2p.shape),
                resident(wop.shape), resident(bop.shape),
            ],
            # TODO(synk): output is lane-sparse (pack of 128 lanes); only ~3%
            # of HBM bytes, so a lane-dense repack is left un-applied.
            out_specs=pl.BlockSpec((tile_p, no), lambda i: (i, 0)),
        ),
        compiler_params=pltpu.CompilerParams(
            dimension_semantics=("parallel",),   # shard batch tiles across TCs (v7x)
            vmem_limit_bytes=32 * 1024 * 1024,   # safe on v5e/v6e/v7x; headroom for big tiles
        ),
        cost_estimate=pl.CostEstimate(
            flops=flops, transcendentals=0, bytes_accessed=bytes_accessed),
    )(xp, w1p, b1p, w2p, b2p, wop, bop)

    # [prows_pad, pack] row-major == [B_pad, 1]; drop padded rows.
    # TODO(synk): for tiny batches a plain fused jnp expression is at least
    # as fast as launching this kernel.
    return out.reshape(B_pad, 1)[:B]


def init_params(key, n_input, n_hidden):
    """Deterministic synthetic init (PyTorch-like uniform ranges)."""
    assert len(n_hidden) == 2, "this script reproduces n_hidden=[h0, h1]"
    k1, k2, k3, k4, k5, k6 = jax.random.split(key, 6)

    def lin(kw, kb, fan_in, fan_out):
        bound = 1.0 / jnp.sqrt(fan_in)
        w = jax.random.uniform(kw, (fan_in, fan_out), jnp.float32, -bound, bound)
        b = jax.random.uniform(kb, (1, fan_out), jnp.float32, -bound, bound)
        return w, b

    w1, b1 = lin(k1, k2, n_input, n_hidden[0])
    w2, b2 = lin(k3, k4, n_hidden[0], n_hidden[1])
    wo, bo = lin(k5, k6, n_hidden[1], 1)
    return dict(w1=w1, b1=b1, w2=w2, b2=b2, wo=wo, bo=bo)


def jppnet_reference(x, p):
    h = x @ p["w1"] + p["b1"]
    h = jnp.maximum(h, 0.0)
    h = h @ p["w2"] + p["b2"]
    h = jnp.maximum(h, 0.0)
    return h @ p["wo"] + p["bo"]


if __name__ == "__main__":
    # Small demo shapes; B deliberately not a multiple of PACK or the tile
    # so the padding / remainder path is exercised.
    B, n_input, n_hidden = 300, 32, [32, 32]

    key = jax.random.PRNGKey(0)
    kx, kparam = jax.random.split(key)
    x = jax.random.normal(kx, (B, n_input), jnp.float32)
    params = init_params(kparam, n_input, n_hidden)

    # Pack once, outside the forward (hoisted per perf review).  Keep f32 MXU
    # inputs so the 1e-4 correctness check below holds; use
    # mxu_dtype=jnp.bfloat16 when the application tolerates ~1e-3 error.
    packed = pack_params(params, mxu_dtype=jnp.float32)

    fwd = jax.jit(jppnet_forward)
    out = jax.block_until_ready(fwd(x, packed))

    ref = jppnet_reference(x, params)
    assert out.shape == (B, 1)
    err = float(jnp.max(jnp.abs(out - ref)))
    assert jnp.allclose(out, ref, atol=1e-4, rtol=1e-4), err

    print("KERNEL_OK")
</pallas_src>

<mosaic_0001>
module attributes {stable_mosaic.version = 11 : i64} {
  func.func @jppnet_kernel(%arg0: i32, %arg1: memref<16x256xf32, #tpu.memory_space<vmem>>, %arg2: memref<256x256xf32, #tpu.memory_space<vmem>>, %arg3: memref<1x256xf32, #tpu.memory_space<vmem>>, %arg4: memref<256x256xf32, #tpu.memory_space<vmem>>, %arg5: memref<1x256xf32, #tpu.memory_space<vmem>>, %arg6: memref<256x8xf32, #tpu.memory_space<vmem>>, %arg7: memref<1x8xf32, #tpu.memory_space<vmem>>, %arg8: memref<16x8xf32, #tpu.memory_space<vmem>>) attributes {dimension_semantics = [#tpu.dimension_semantics<parallel>], iteration_bounds = array<i64: 3>, scalar_prefetch = 0 : i64, scratch_operands = 0 : i64, tpu.core_type = #tpu.core_type<tc>, window_params = [{transform_indices = @transform_0, window_bounds = array<i64: 16, 256>}, {pipeline_mode = #tpu.pipeline_mode<synchronous>, transform_indices = @transform_1, window_bounds = array<i64: 256, 256>}, {pipeline_mode = #tpu.pipeline_mode<synchronous>, transform_indices = @transform_2, window_bounds = array<i64: 1, 256>}, {pipeline_mode = #tpu.pipeline_mode<synchronous>, transform_indices = @transform_3, window_bounds = array<i64: 256, 256>}, {pipeline_mode = #tpu.pipeline_mode<synchronous>, transform_indices = @transform_4, window_bounds = array<i64: 1, 256>}, {pipeline_mode = #tpu.pipeline_mode<synchronous>, transform_indices = @transform_5, window_bounds = array<i64: 256, 8>}, {pipeline_mode = #tpu.pipeline_mode<synchronous>, transform_indices = @transform_6, window_bounds = array<i64: 1, 8>}, {transform_indices = @transform_7, window_bounds = array<i64: 16, 8>}]} {
    %c0 = arith.constant 0 : index
    %c0_0 = arith.constant 0 : index
    %0 = vector.load %arg1[%c0, %c0_0] : memref<16x256xf32, #tpu.memory_space<vmem>>, vector<16x256xf32>
    %c0_1 = arith.constant 0 : index
    %c0_2 = arith.constant 0 : index
    %1 = vector.load %arg2[%c0_1, %c0_2] : memref<256x256xf32, #tpu.memory_space<vmem>>, vector<256x256xf32>
    %cst = arith.constant dense<0.000000e+00> : vector<16x256xf32>
    %2 = tpu.matmul %0, %1, %cst {dimension_numbers = #tpu.dot_dimension_numbers<[1], [0], [0], [1], [0, 0, 1, 1], [], []>} : vector<16x256xf32>, vector<256x256xf32>, vector<16x256xf32> -> vector<16x256xf32>
    %c0_3 = arith.constant 0 : index
    %c0_4 = arith.constant 0 : index
    %3 = vector.load %arg3[%c0_3, %c0_4] : memref<1x256xf32, #tpu.memory_space<vmem>>, vector<1x256xf32>
    %4 = vector.broadcast %3 : vector<1x256xf32> to vector<16x256xf32>
    %5 = arith.addf %2, %4 : vector<16x256xf32>
    %cst_5 = arith.constant 0.000000e+00 : f32
    %6 = vector.broadcast %cst_5 : f32 to vector<16x256xf32>
    %7 = arith.maximumf %5, %6 : vector<16x256xf32>
    %c0_6 = arith.constant 0 : index
    %c0_7 = arith.constant 0 : index
    %8 = vector.load %arg4[%c0_6, %c0_7] : memref<256x256xf32, #tpu.memory_space<vmem>>, vector<256x256xf32>
    %cst_8 = arith.constant dense<0.000000e+00> : vector<16x256xf32>
    %9 = tpu.matmul %7, %8, %cst_8 {dimension_numbers = #tpu.dot_dimension_numbers<[1], [0], [0], [1], [0, 0, 1, 1], [], []>} : vector<16x256xf32>, vector<256x256xf32>, vector<16x256xf32> -> vector<16x256xf32>
    %c0_9 = arith.constant 0 : index
    %c0_10 = arith.constant 0 : index
    %10 = vector.load %arg5[%c0_9, %c0_10] : memref<1x256xf32, #tpu.memory_space<vmem>>, vector<1x256xf32>
    %11 = vector.broadcast %10 : vector<1x256xf32> to vector<16x256xf32>
    %12 = arith.addf %9, %11 : vector<16x256xf32>
    %cst_11 = arith.constant 0.000000e+00 : f32
    %13 = vector.broadcast %cst_11 : f32 to vector<16x256xf32>
    %14 = arith.maximumf %12, %13 : vector<16x256xf32>
    %c0_12 = arith.constant 0 : index
    %c0_13 = arith.constant 0 : index
    %15 = vector.load %arg6[%c0_12, %c0_13] : memref<256x8xf32, #tpu.memory_space<vmem>>, vector<256x8xf32>
    %cst_14 = arith.constant dense<0.000000e+00> : vector<16x8xf32>
    %16 = tpu.matmul %14, %15, %cst_14 {dimension_numbers = #tpu.dot_dimension_numbers<[1], [0], [0], [1], [0, 0, 1, 1], [], []>} : vector<16x256xf32>, vector<256x8xf32>, vector<16x8xf32> -> vector<16x8xf32>
    %c0_15 = arith.constant 0 : index
    %c0_16 = arith.constant 0 : index
    %17 = vector.load %arg7[%c0_15, %c0_16] : memref<1x8xf32, #tpu.memory_space<vmem>>, vector<1x8xf32>
    %18 = vector.broadcast %17 : vector<1x8xf32> to vector<16x8xf32>
    %19 = arith.addf %16, %18 : vector<16x8xf32>
    %c0_17 = arith.constant 0 : index
    %c0_18 = arith.constant 0 : index
    %20 = vector.load %arg8[%c0_17, %c0_18] : memref<16x8xf32, #tpu.memory_space<vmem>>, vector<16x8xf32>
    tpu.vector_store %arg8[%c0_17, %c0_18], %19 {strides = array<i32>} : memref<16x8xf32, #tpu.memory_space<vmem>>, vector<16x8xf32>,
    return
  }
  func.func @transform_0(%arg0: i32) -> (i32, i32) {
    %c0_i32 = arith.constant 0 : i32
    %c0_i32_0 = arith.constant 0 : i32
    return %arg0, %c0_i32 : i32, i32
  }
  func.func @transform_1(%arg0: i32) -> (i32, i32) {
    %c0_i32 = arith.constant 0 : i32
    %c0_i32_0 = arith.constant 0 : i32
    %c0_i32_1 = arith.constant 0 : i32
    return %c0_i32, %c0_i32_0 : i32, i32
  }
  func.func @transform_2(%arg0: i32) -> (i32, i32) {
    %c0_i32 = arith.constant 0 : i32
    %c0_i32_0 = arith.constant 0 : i32
    %c0_i32_1 = arith.constant 0 : i32
    return %c0_i32, %c0_i32_0 : i32, i32
  }
  func.func @transform_3(%arg0: i32) -> (i32, i32) {
    %c0_i32 = arith.constant 0 : i32
    %c0_i32_0 = arith.constant 0 : i32
    %c0_i32_1 = arith.constant 0 : i32
    return %c0_i32, %c0_i32_0 : i32, i32
  }
  func.func @transform_4(%arg0: i32) -> (i32, i32) {
    %c0_i32 = arith.constant 0 : i32
    %c0_i32_0 = arith.constant 0 : i32
    %c0_i32_1 = arith.constant 0 : i32
    return %c0_i32, %c0_i32_0 : i32, i32
  }
  func.func @transform_5(%arg0: i32) -> (i32, i32) {
    %c0_i32 = arith.constant 0 : i32
    %c0_i32_0 = arith.constant 0 : i32
    %c0_i32_1 = arith.constant 0 : i32
    return %c0_i32, %c0_i32_0 : i32, i32
  }
  func.func @transform_6(%arg0: i32) -> (i32, i32) {
    %c0_i32 = arith.constant 0 : i32
    %c0_i32_0 = arith.constant 0 : i32
    %c0_i32_1 = arith.constant 0 : i32
    return %c0_i32, %c0_i32_0 : i32, i32
  }
  func.func @transform_7(%arg0: i32) -> (i32, i32) {
    %c0_i32 = arith.constant 0 : i32
    %c0_i32_0 = arith.constant 0 : i32
    return %arg0, %c0_i32 : i32, i32
  }
}

</mosaic_0001>

<llo_original>
// kernel: jppnet_forward.1
$region0: #{jppnet_forward.1}
  #allocation0 [shape = 'u32[]', space=smem, size = 0x4, offset = 0x4, fixed_abs, tag = 'smem constant byte address 0x4 - core index']
  #allocation1 [shape = 'u32[144,128]{1,0:T(1,128)}', space=vmem, size = 0x12000, scoped, tag = 'internal scratch']
  %s0 = inlined_call_operand.vmem [shape: f32[48,256], index: 0, kind: input, shape index: {}]
  %s1 = inlined_call_operand.vmem [shape: f32[256,256], index: 1, kind: input, shape index: {}]
  %s2 = inlined_call_operand.vmem [shape: f32[1,256], index: 2, kind: input, shape index: {}]
  %s3 = inlined_call_operand.vmem [shape: f32[256,256], index: 3, kind: input, shape index: {}]
  %s4 = inlined_call_operand.vmem [shape: f32[1,256], index: 4, kind: input, shape index: {}]
  %s5 = inlined_call_operand.vmem [shape: f32[256,8], index: 5, kind: input, shape index: {}]
  %s6 = inlined_call_operand.vmem [shape: f32[1,8], index: 6, kind: input, shape index: {}]
  %s7 = inlined_call_operand.vmem [shape: f32[48,8], index: 7, kind: output, shape index: {}]
  %s8 = sld [smem:[#allocation0]]
  $region61: #{jppnet_forward.1} parent=0
    _
  %s10 = ssub.s32 1, %s8
  %s11 = scalar_select 0, %s10, %s8
  loop: start=0, step=1, limit=5
  $region2: #{jppnet_forward.1} parent=0 // loop_pre_header
    _
  $region3: #{jppnet_forward.1} parent=0 // loop_header
    %s13 = sphi 0, %s17
    %p14 = scmp.ge.s32.totalorder %s13, 5
    %s23 = sphi 0, %s25
    %s26 = sphi 0, %s23
    %s27 = sphi 0, %s26
    %s43 = sphi 0, %s27
    %s47 = sphi 0, %s47
    %s49 = sphi 0, %s47
    %s50 = sphi 0, %s49
    %s64 = sphi 0, %s50
    %s68 = sphi 0, %s68
    %s70 = sphi 0, %s68
    %s71 = sphi 0, %s70
    %s85 = sphi 0, %s71
    %s89 = sphi 0, %s89
    %s91 = sphi 0, %s89
    %s92 = sphi 0, %s91
    %s106 = sphi 0, %s92
    %s110 = sphi 0, %s110
    %s112 = sphi 0, %s110
    %s113 = sphi 0, %s112
    %s127 = sphi 0, %s113
    %s131 = sphi 0, %s131
    %s133 = sphi 0, %s131
    %s134 = sphi 0, %s133
    %s148 = sphi 0, %s134
    %s152 = sphi 0, %s152
    %s154 = sphi 0, %s152
    %s155 = sphi 0, %s154
    %s169 = sphi 0, %s155
    %s175 = sphi 0, %s177
    %s178 = sphi 0, %s175
    %s179 = sphi 0, %s178
    %s195 = sphi 0, %s179
  $region4: #{jppnet_forward.1} parent=0 // loop_header_branch
    %16 = sbr.rel (%p14) target = $region8
  $region5: #{jppnet_forward.1} parent=0 // loop_body
    %s18 = ssub.s32 %s13, 1
    %s19 = ssub.s32 %s13, 2
    %s20 = sadd.s32 %s13, 1
    %s21 = ssub.s32 %s13, %s20
    %p22 = scmp.eq.s32.totalorder %s21, 0
    %s24 = sadd.s32 %s23, 1
    %s25 = scalar_select %p22, %s23, %s24
    %p28 = pneg %p22
    %p29 = scmp.eq.s32.totalorder %s13, 2
    %p30 = por %p28, %p29
    %p31 = scmp.ne.s32.totalorder %s23, %s26
    %p32 = scmp.eq.s32.totalorder %s13, 0
    %p33 = por %p31, %p32
    %p34 = scmp.ne.s32.totalorder %s23, %s26
    %p35 = scmp.eq.s32.totalorder %s18, 2
    %p36 = por %p34, %p35
    %p37 = scmp.ne.s32.totalorder %s26, %s27
    %p38 = scmp.eq.s32.totalorder %s18, 0
    %p39 = por %p37, %p38
    %p40 = scmp.ne.s32.totalorder %s26, %s27
    %p41 = scmp.eq.s32.totalorder %s19, 2
    %p42 = por %p40, %p41
    %p44 = scmp.ne.s32.totalorder %s27, %s43
    %p45 = scmp.eq.s32.totalorder %s19, 0
    %p46 = por %p44, %p45
    %s48 = sadd.s32 %s47, 1
    %p51 = scmp.eq.s32.totalorder %s13, 2
    %p52 = scmp.ne.s32.totalorder %s47, %s49
    %p53 = scmp.eq.s32.totalorder %s13, 0
    %p54 = por %p52, %p53
    %p55 = scmp.ne.s32.totalorder %s47, %s49
    %p56 = scmp.eq.s32.totalorder %s18, 2
    %p57 = por %p55, %p56
    %p58 = scmp.ne.s32.totalorder %s49, %s50
    %p59 = scmp.eq.s32.totalorder %s18, 0
    %p60 = por %p58, %p59
    %p61 = scmp.ne.s32.totalorder %s49, %s50
    %p62 = scmp.eq.s32.totalorder %s19, 2
    %p63 = por %p61, %p62
    %p65 = scmp.ne.s32.totalorder %s50, %s64
    %p66 = scmp.eq.s32.totalorder %s19, 0
    %p67 = por %p65, %p66
    %s69 = sadd.s32 %s68, 1
    %p72 = scmp.eq.s32.totalorder %s13, 2
    %p73 = scmp.ne.s32.totalorder %s68, %s70
    %p74 = scmp.eq.s32.totalorder %s13, 0
    %p75 = por %p73, %p74
    %p76 = scmp.ne.s32.totalorder %s68, %s70
    %p77 = scmp.eq.s32.totalorder %s18, 2
    %p78 = por %p76, %p77
    %p79 = scmp.ne.s32.totalorder %s70, %s71
    %p80 = scmp.eq.s32.totalorder %s18, 0
    %p81 = por %p79, %p80
    %p82 = scmp.ne.s32.totalorder %s70, %s71
    %p83 = scmp.eq.s32.totalorder %s19, 2
    %p84 = por %p82, %p83
    %p86 = scmp.ne.s32.totalorder %s71, %s85
    %p87 = scmp.eq.s32.totalorder %s19, 0
    %p88 = por %p86, %p87
    %s90 = sadd.s32 %s89, 1
    %p93 = scmp.eq.s32.totalorder %s13, 2
    %p94 = scmp.ne.s32.totalorder %s89, %s91
    %p95 = scmp.eq.s32.totalorder %s13, 0
    %p96 = por %p94, %p95
    %p97 = scmp.ne.s32.totalorder %s89, %s91
    %p98 = scmp.eq.s32.totalorder %s18, 2
    %p99 = por %p97, %p98
    %p100 = scmp.ne.s32.totalorder %s91, %s92
    %p101 = scmp.eq.s32.totalorder %s18, 0
    %p102 = por %p100, %p101
    %p103 = scmp.ne.s32.totalorder %s91, %s92
    %p104 = scmp.eq.s32.totalorder %s19, 2
    %p105 = por %p103, %p104
    %p107 = scmp.ne.s32.totalorder %s92, %s106
    %p108 = scmp.eq.s32.totalorder %s19, 0
    %p109 = por %p107, %p108
    %s111 = sadd.s32 %s110, 1
    %p114 = scmp.eq.s32.totalorder %s13, 2
    %p115 = scmp.ne.s32.totalorder %s110, %s112
    %p116 = scmp.eq.s32.totalorder %s13, 0
    %p117 = por %p115, %p116
    %p118 = scmp.ne.s32.totalorder %s110, %s112
    %p119 = scmp.eq.s32.totalorder %s18, 2
    %p120 = por %p118, %p119
    %p121 = scmp.ne.s32.totalorder %s112, %s113
    %p122 = scmp.eq.s32.totalorder %s18, 0
    %p123 = por %p121, %p122
    %p124 = scmp.ne.s32.totalorder %s112, %s113
    %p125 = scmp.eq.s32.totalorder %s19, 2
    %p126 = por %p124, %p125
    %p128 = scmp.ne.s32.totalorder %s113, %s127
    %p129 = scmp.eq.s32.totalorder %s19, 0
    %p130 = por %p128, %p129
    %s132 = sadd.s32 %s131, 1
    %p135 = scmp.eq.s32.totalorder %s13, 2
    %p136 = scmp.ne.s32.totalorder %s131, %s133
    %p137 = scmp.eq.s32.totalorder %s13, 0
    %p138 = por %p136, %p137
    %p139 = scmp.ne.s32.totalorder %s131, %s133
    %p140 = scmp.eq.s32.totalorder %s18, 2
    %p141 = por %p139, %p140
    %p142 = scmp.ne.s32.totalorder %s133, %s134
    %p143 = scmp.eq.s32.totalorder %s18, 0
    %p144 = por %p142, %p143
    %p145 = scmp.ne.s32.totalorder %s133, %s134
    %p146 = scmp.eq.s32.totalorder %s19, 2
    %p147 = por %p145, %p146
    %p149 = scmp.ne.s32.totalorder %s134, %s148
    %p150 = scmp.eq.s32.totalorder %s19, 0
    %p151 = por %p149, %p150
    %s153 = sadd.s32 %s152, 1
    %p156 = scmp.eq.s32.totalorder %s13, 2
    %p157 = scmp.ne.s32.totalorder %s152, %s154
    %p158 = scmp.eq.s32.totalorder %s13, 0
    %p159 = por %p157, %p158
    %p160 = scmp.ne.s32.totalorder %s152, %s154
    %p161 = scmp.eq.s32.totalorder %s18, 2
    %p162 = por %p160, %p161
    %p163 = scmp.ne.s32.totalorder %s154, %s155
    %p164 = scmp.eq.s32.totalorder %s18, 0
    %p165 = por %p163, %p164
    %p166 = scmp.ne.s32.totalorder %s154, %s155
    %p167 = scmp.eq.s32.totalorder %s19, 2
    %p168 = por %p166, %p167
    %p170 = scmp.ne.s32.totalorder %s155, %s169
    %p171 = scmp.eq.s32.totalorder %s19, 0
    %p172 = por %p170, %p171
    %s173 = ssub.s32 %s13, %s20
    %p174 = scmp.eq.s32.totalorder %s173, 0
    %s176 = sadd.s32 %s175, 1
    %s177 = scalar_select %p174, %s175, %s176
    %p180 = pneg %p174
    %p181 = scmp.eq.s32.totalorder %s13, 2
    %p182 = por %p180, %p181
    %p183 = scmp.ne.s32.totalorder %s175, %s178
    %p184 = scmp.eq.s32.totalorder %s13, 0
    %p185 = por %p183, %p184
    %p186 = scmp.ne.s32.totalorder %s175, %s178
    %p187 = scmp.eq.s32.totalorder %s18, 2
    %p188 = por %p186, %p187
    %p189 = scmp.ne.s32.totalorder %s178, %s179
    %p190 = scmp.eq.s32.totalorder %s18, 0
    %p191 = por %p189, %p190
    %p192 = scmp.ne.s32.totalorder %s178, %s179
    %p193 = scmp.eq.s32.totalorder %s19, 2
    %p194 = por %p192, %p193
    %p196 = scmp.ne.s32.totalorder %s179, %s195
    %p197 = scmp.eq.s32.totalorder %s19, 0
    %p198 = por %p196, %p197
    %p199 = scmp.le.s32.totalorder 1, %s13
    %p200 = scmp.lt.s32.totalorder %s13, 4
    %p201 = pnand %p199, %p200
    %p202 = pneg %p201
    // Predicated region
    $region9: #{jppnet_forward.1} parent=5 // pred_check
      _
    $region10: #{jppnet_forward.1} parent=5 // pred_check_branch
      %204 = sbr.rel (%p201) target = $region12
    $region11: #{jppnet_forward.1} parent=5 // pred_region
      %s205 = ssub.s32 %s13, 1
      // Predicated region
      $region13: #{jppnet_forward.1} parent=11 // pred_check
        %p206 = pneg %p60
      $region14: #{jppnet_forward.1} parent=11 // pred_check_branch
        %208 = sbr.rel (%p206) target = $region16
      $region15: #{jppnet_forward.1} parent=11 // pred_region
        _
      $region16: #{jppnet_forward.1} parent=11 // pred_fallthru
        _
      // Predicated region
      $region17: #{jppnet_forward.1} parent=11 // pred_check
        %p209 = pneg %p81
      $region18: #{jppnet_forward.1} parent=11 // pred_check_branch
        %211 = sbr.rel (%p209) target = $region20
      $region19: #{jppnet_forward.1} parent=11 // pred_region
        _
      $region20: #{jppnet_forward.1} parent=11 // pred_fallthru
        _
      // Predicated region
      $region21: #{jppnet_forward.1} parent=11 // pred_check
        %p212 = pneg %p102
      $region22: #{jppnet_forward.1} parent=11 // pred_check_branch
        %214 = sbr.rel (%p212) target = $region24
      $region23: #{jppnet_forward.1} parent=11 // pred_region
        _
      $region24: #{jppnet_forward.1} parent=11 // pred_fallthru
        _
      // Predicated region
      $region25: #{jppnet_forward.1} parent=11 // pred_check
        %p215 = pneg %p123
      $region26: #{jppnet_forward.1} parent=11 // pred_check_branch
        %217 = sbr.rel (%p215) target = $region28
      $region27: #{jppnet_forward.1} parent=11 // pred_region
        _
      $region28: #{jppnet_forward.1} parent=11 // pred_fallthru
        _
      // Predicated region
      $region29: #{jppnet_forward.1} parent=11 // pred_check
        %p218 = pneg %p144
      $region30: #{jppnet_forward.1} parent=11 // pred_check_branch
        %220 = sbr.rel (%p218) target = $region32
      $region31: #{jppnet_forward.1} parent=11 // pred_region
        _
      $region32: #{jppnet_forward.1} parent=11 // pred_fallthru
        _
      // Predicated region
      $region33: #{jppnet_forward.1} parent=11 // pred_check
        %p221 = pneg %p165
      $region34: #{jppnet_forward.1} parent=11 // pred_check_branch
        %223 = sbr.rel (%p221) target = $region36
      $region35: #{jppnet_forward.1} parent=11 // pred_region
        _
      $region36: #{jppnet_forward.1} parent=11 // pred_fallthru
        _
    $region12: #{jppnet_forward.1} parent=5 // pred_fallthru
      _
    %p224 = scmp.lt.s32.totalorder %s13, 3
    // Predicated region
    $region37: #{jppnet_forward.1} parent=5 // pred_check
      %p225 = pneg %p224
    $region38: #{jppnet_forward.1} parent=5 // pred_check_branch
      %227 = sbr.rel (%p225) target = $region40
    $region39: #{jppnet_forward.1} parent=5 // pred_region
      // Predicated region
      $region41: #{jppnet_forward.1} parent=39 // pred_check
        %p228 = pneg %p33
      $region42: #{jppnet_forward.1} parent=39 // pred_check_branch
        %230 = sbr.rel (%p228) target = $region44
      $region43: #{jppnet_forward.1} parent=39 // pred_region
        %s231 = smul.u32 2, %s13
        %p232 = scmp.lt.s32.totalorder %s231, 5
        %s233 = scalar_select %p232, %s231, 5
        %s234 = smul.addr %s233, 2
        %s235 = smul.addr %s234, 8
        %s236 = scalar_lea.vmem %s0, %s235
        %s237 = smul.u32 2, %s13
      $region44: #{jppnet_forward.1} parent=39 // pred_fallthru
        _
    $region40: #{jppnet_forward.1} parent=5 // pred_fallthru
      _
    %p238 = scmp.le.s32.totalorder 1, %s13
    %p239 = scmp.lt.s32.totalorder %s13, 4
    %p240 = pnand %p238, %p239
    %p241 = pneg %p240
    // Predicated region
    $region45: #{jppnet_forward.1} parent=5 // pred_check
      _
    $region46: #{jppnet_forward.1} parent=5 // pred_check_branch
      %243 = sbr.rel (%p240) target = $region48
    $region47: #{jppnet_forward.1} parent=5 // pred_region
      %s244 = ssub.s32 %s13, 1
      %s245 = smul.u32 2, %s18
      %p246 = scmp.lt.s32.totalorder %s245, 5
      %s247 = scalar_select %p246, %s245, 5
      %s248 = smul.addr %s247, 2
      %s249 = smul.addr %s248, 8
      %s250 = scalar_lea.vmem %s0, %s249
      %p251 = pneg %p39
      %p252 = pneg %p36
      %p253 = pneg %p60
      %p254 = pneg %p57
      %p255 = pneg %p81
      %p256 = pneg %p78
      %p257 = pneg %p102
      %p258 = pneg %p99
      %p259 = pneg %p123
      %p260 = pneg %p120
      %p261 = pneg %p144
      %p262 = pneg %p141
      %p263 = pneg %p165
      %p264 = pneg %p162
      %p265 = pneg %p191
      %p266 = pneg %p188
      %s267 = smul.u32 2, %s18
      %p268 = scmp.lt.s32.totalorder %s267, 5
      %s269 = scalar_select %p268, %s267, 5
      %s270 = smul.addr %s269, 8
      %s271 = scalar_lea.vmem %s7, %s270
      %s272 = smul.u32 2, %s18
      %p273 = scmp.lt.s32.totalorder %s272, 5
      %s274 = scalar_select %p273, %s272, 5
      %s275 = smul.addr %s274, 2
      %s276 = smul.addr %s275, 8
      %s277 = scalar_lea.vmem %s0, %s276
      %s278 = smul.u32 2, %s18
      %s279 = smul.u32 2, %s18
      %p280 = scmp.lt.s32.totalorder %s279, 5
      %s281 = scalar_select %p280, %s279, 5
      %s282 = smul.addr %s281, 8
      %s283 = scalar_lea.vmem %s7, %s282
      %s284 = smul.u32 2, %s18
      %v285 = vld [vmem:[%s277] sm:$0xff]
      %v286 = vld [vmem:[%s277 + $0x8] sm:$0xff]
      %v287 = vld [vmem:[%s277 + $0x10] sm:$0xff]
      %v288 = vld [vmem:[%s277 + $0x18] sm:$0xff]
      %v289 = vld [vmem:[%s1] sm:$0xff]
      %v290 = vld [vmem:[%s1 + $0x8] sm:$0xff]
      %v291 = vld [vmem:[%s1 + $0x10] sm:$0xff]
      %v292 = vld [vmem:[%s1 + $0x18] sm:$0xff]
      %v293 = vld [vmem:[%s1 + $0x20] sm:$0xff]
      %v294 = vld [vmem:[%s1 + $0x28] sm:$0xff]
      %v295 = vld [vmem:[%s1 + $0x30] sm:$0xff]
      %v296 = vld [vmem:[%s1 + $0x38] sm:$0xff]
      %v297 = vld [vmem:[%s1 + $0x40] sm:$0xff]
      %v298 = vld [vmem:[%s1 + $0x48] sm:$0xff]
      %v299 = vld [vmem:[%s1 + $0x50] sm:$0xff]
      %v300 = vld [vmem:[%s1 + $0x58] sm:$0xff]
      %v301 = vld [vmem:[%s1 + $0x60] sm:$0xff]
      %v302 = vld [vmem:[%s1 + $0x68] sm:$0xff]
      %v303 = vld [vmem:[%s1 + $0x70] sm:$0xff]
      %v304 = vld [vmem:[%s1 + $0x78] sm:$0xff]
      %v305 = vld [vmem:[%s1 + $0x80] sm:$0xff]
      %v306 = vld [vmem:[%s1 + $0x88] sm:$0xff]
      %v307 = vld [vmem:[%s1 + $0x90] sm:$0xff]
      %v308 = vld [vmem:[%s1 + $0x98] sm:$0xff]
      %v309 = vld [vmem:[%s1 + $0xa0] sm:$0xff]
      %v310 = vld [vmem:[%s1 + $0xa8] sm:$0xff]
      %v311 = vld [vmem:[%s1 + $0xb0] sm:$0xff]
      %v312 = vld [vmem:[%s1 + $0xb8] sm:$0xff]
      %v313 = vld [vmem:[%s1 + $0xc0] sm:$0xff]
      %v314 = vld [vmem:[%s1 + $0xc8] sm:$0xff]
      %v315 = vld [vmem:[%s1 + $0xd0] sm:$0xff]
      %v316 = vld [vmem:[%s1 + $0xd8] sm:$0xff]
      %v317 = vld [vmem:[%s1 + $0xe0] sm:$0xff]
      %v318 = vld [vmem:[%s1 + $0xe8] sm:$0xff]
      %v319 = vld [vmem:[%s1 + $0xf0] sm:$0xff]
      %v320 = vld [vmem:[%s1 + $0xf8] sm:$0xff]
      %v321 = vld [vmem:[%s1 + $0x100] sm:$0xff]
      %v322 = vld [vmem:[%s1 + $0x108] sm:$0xff]
      %v323 = vld [vmem:[%s1 + $0x110] sm:$0xff]
      %v324 = vld [vmem:[%s1 + $0x118] sm:$0xff]
      %v325 = vld [vmem:[%s1 + $0x120] sm:$0xff]
      %v326 = vld [vmem:[%s1 + $0x128] sm:$0xff]
      %v327 = vld [vmem:[%s1 + $0x130] sm:$0xff]
      %v328 = vld [vmem:[%s1 + $0x138] sm:$0xff]
      %v329 = vld [vmem:[%s1 + $0x140] sm:$0xff]
      %v330 = vld [vmem:[%s1 + $0x148] sm:$0xff]
      %v331 = vld [vmem:[%s1 + $0x150] sm:$0xff]
      %v332 = vld [vmem:[%s1 + $0x158] sm:$0xff]
      %v333 = vld [vmem:[%s1 + $0x160] sm:$0xff]
      %v334 = vld [vmem:[%s1 + $0x168] sm:$0xff]
      %v335 = vld [vmem:[%s1 + $0x170] sm:$0xff]
      %v336 = vld [vmem:[%s1 + $0x178] sm:$0xff]
      %v337 = vld [vmem:[%s1 + $0x180] sm:$0xff]
      %v338 = vld [vmem:[%s1 + $0x188] sm:$0xff]
      %v339 = vld [vmem:[%s1 + $0x190] sm:$0xff]
      %v340 = vld [vmem:[%s1 + $0x198] sm:$0xff]
      %v341 = vld [vmem:[%s1 + $0x1a0] sm:$0xff]
      %v342 = vld [vmem:[%s1 + $0x1a8] sm:$0xff]
      %v343 = vld [vmem:[%s1 + $0x1b0] sm:$0xff]
      %v344 = vld [vmem:[%s1 + $0x1b8] sm:$0xff]
      %v345 = vld [vmem:[%s1 + $0x1c0] sm:$0xff]
      %v346 = vld [vmem:[%s1 + $0x1c8] sm:$0xff]
      %v347 = vld [vmem:[%s1 + $0x1d0] sm:$0xff]
      %v348 = vld [vmem:[%s1 + $0x1d8] sm:$0xff]
      %v349 = vld [vmem:[%s1 + $0x1e0] sm:$0xff]
      %v350 = vld [vmem:[%s1 + $0x1e8] sm:$0xff]
      %v351 = vld [vmem:[%s1 + $0x1f0] sm:$0xff]
      %v352 = vld [vmem:[%s1 + $0x1f8] sm:$0xff]
      %v353 = vld [vmem:[%s2] sm:$0x3]
      %v355 = vlaneseq
      %v356 = vshrl.u32 %v355, 7
      %v357 = vsub.s32 0, %v356
      %v358 = vrot.slane %v353, %v357
      %v359 = vlaneseq
      %v360 = vshrl.u32 %v359, 7
      %v361 = vsub.s32 1, %v360
      %v362 = vrot.slane %v353, %v361
      %365 = vmatprep.subr.mxu0 %v290
      %366 = vmatpush1.msra.mxu0 %v289
      %367 = vmatprep.subr.mxu0 %v292
      %368 = vmatpush1.msra.mxu0 %v291
      %369 = vmatprep.subr.mxu0 %v294
      %370 = vmatpush1.msra.mxu0 %v293
      %371 = vmatprep.subr.mxu0 %v296
      %372 = vmatpush1.msra.mxu0 %v295
      %373 = vmatprep.subr.mxu0 %v298
      %374 = vmatpush1.msra.mxu0 %v297
      %375 = vmatprep.subr.mxu0 %v300
      %376 = vmatpush1.msra.mxu0 %v299
      %377 = vmatprep.subr.mxu0 %v302
      %378 = vmatpush1.msra.mxu0 %v301
      %379 = vmatprep.subr.mxu0 %v304
      %380 = vmatpush1.msra.mxu0 %v303
      %381 = vmatprep.subr.mxu0 %v306
      %382 = vmatpush1.msra.mxu0 %v305
      %383 = vmatprep.subr.mxu0 %v308
      %384 = vmatpush1.msra.mxu0 %v307
      %385 = vmatprep.subr.mxu0 %v310
      %386 = vmatpush1.msra.mxu0 %v309
      %387 = vmatprep.subr.mxu0 %v312
      %388 = vmatpush1.msra.mxu0 %v311
      %389 = vmatprep.subr.mxu0 %v314
      %390 = vmatpush1.msra.mxu0 %v313
      %391 = vmatprep.subr.mxu0 %v316
      %392 = vmatpush1.msra.mxu0 %v315
      %393 = vmatprep.subr.mxu0 %v318
      %394 = vmatpush1.msra.mxu0 %v317
      %395 = vmatprep.subr.mxu0 %v320
      %396 = vmatpush1.msra.mxu0 %v319
      %397 = vmatprep.subr.mxu0 %v322
      %398 = vmatpush1.msra.mxu0 %v321
      %399 = vmatprep.subr.mxu0 %v324
      %400 = vmatpush1.msra.mxu0 %v323
      %401 = vmatprep.subr.mxu0 %v326
      %402 = vmatpush1.msra.mxu0 %v325
      %403 = vmatprep.subr.mxu0 %v328
      %404 = vmatpush1.msra.mxu0 %v327
      %405 = vmatprep.subr.mxu0 %v330
      %406 = vmatpush1.msra.mxu0 %v329
      %407 = vmatprep.subr.mxu0 %v332
      %408 = vmatpush1.msra.mxu0 %v331
      %409 = vmatprep.subr.mxu0 %v334
      %410 = vmatpush1.msra.mxu0 %v333
      %411 = vmatprep.subr.mxu0 %v336
      %412 = vmatpush1.msra.mxu0 %v335
      %413 = vmatprep.subr.mxu0 %v338
      %414 = vmatpush1.msra.mxu0 %v337
      %415 = vmatprep.subr.mxu0 %v340
      %416 = vmatpush1.msra.mxu0 %v339
      %417 = vmatprep.subr.mxu0 %v342
      %418 = vmatpush1.msra.mxu0 %v341
      %419 = vmatprep.subr.mxu0 %v344
      %420 = vmatpush1.msra.mxu0 %v343
      %421 = vmatprep.subr.mxu0 %v346
      %422 = vmatpush1.msra.mxu0 %v345
      %423 = vmatprep.subr.mxu0 %v348
      %424 = vmatpush1.msra.mxu0 %v347
      %425 = vmatprep.subr.mxu0 %v350
      %426 = vmatpush1.msra.mxu0 %v349
      %427 = vmatprep.subr.mxu0 %v352
      %428 = vmatpush1.msra.mxu0 %v351
      %429 = vmatprep.mubr.f32.mxu0 %v286
      %430 = vmatmul.mubr.f32.gmra.mrb[0].mxu0 %v285
      %v431 = vpop.f32.mrb[0].mxu0
      %v432 = vadd.f32 %v358, %v431
      %v433 = vpop.f32.mrb[0].mxu0
      %v434 = vadd.f32 %v362, %v433
      %435 = vmatprep.mubr.f32.mxu0 %v288
      %436 = vmatmul.mubr.f32.gmra.mrb[0].mxu0 %v287
      %v437 = vpop.f32.mrb[0].mxu0
      %v438 = vadd.f32 %v358, %v437
      %v439 = vpop.f32.mrb[0].mxu0
      %v440 = vadd.f32 %v362, %v439
      %441 = vdwg.mxu0
      %v442 = vmax.f32 %v432, 0.0
      %v443 = vmax.f32 %v434, 0.0
      %v444 = vmax.f32 %v438, 0.0
      %v445 = vmax.f32 %v440, 0.0
      %v446 = vld [vmem:[%s3] sm:$0xff]
      %v447 = vld [vmem:[%s3 + $0x8] sm:$0xff]
      %v448 = vld [vmem:[%s3 + $0x10] sm:$0xff]
      %v449 = vld [vmem:[%s3 + $0x18] sm:$0xff]
      %v450 = vld [vmem:[%s3 + $0x20] sm:$0xff]
      %v451 = vld [vmem:[%s3 + $0x28] sm:$0xff]
      %v452 = vld [vmem:[%s3 + $0x30] sm:$0xff]
      %v453 = vld [vmem:[%s3 + $0x38] sm:$0xff]
      %v454 = vld [vmem:[%s3 + $0x40] sm:$0xff]
      %v455 = vld [vmem:[%s3 + $0x48] sm:$0xff]
      %v456 = vld [vmem:[%s3 + $0x50] sm:$0xff]
      %v457 = vld [vmem:[%s3 + $0x58] sm:$0xff]
      %v458 = vld [vmem:[%s3 + $0x60] sm:$0xff]
      %v459 = vld [vmem:[%s3 + $0x68] sm:$0xff]
      %v460 = vld [vmem:[%s3 + $0x70] sm:$0xff]
      %v461 = vld [vmem:[%s3 + $0x78] sm:$0xff]
      %v462 = vld [vmem:[%s3 + $0x80] sm:$0xff]
      %v463 = vld [vmem:[%s3 + $0x88] sm:$0xff]
      %v464 = vld [vmem:[%s3 + $0x90] sm:$0xff]
      %v465 = vld [vmem:[%s3 + $0x98] sm:$0xff]
      %v466 = vld [vmem:[%s3 + $0xa0] sm:$0xff]
      %v467 = vld [vmem:[%s3 + $0xa8] sm:$0xff]
      %v468 = vld [vmem:[%s3 + $0xb0] sm:$0xff]
      %v469 = vld [vmem:[%s3 + $0xb8] sm:$0xff]
      %v470 = vld [vmem:[%s3 + $0xc0] sm:$0xff]
      %v471 = vld [vmem:[%s3 + $0xc8] sm:$0xff]
      %v472 = vld [vmem:[%s3 + $0xd0] sm:$0xff]
      %v473 = vld [vmem:[%s3 + $0xd8] sm:$0xff]
      %v474 = vld [vmem:[%s3 + $0xe0] sm:$0xff]
      %v475 = vld [vmem:[%s3 + $0xe8] sm:$0xff]
      %v476 = vld [vmem:[%s3 + $0xf0] sm:$0xff]
      %v477 = vld [vmem:[%s3 + $0xf8] sm:$0xff]
      %v478 = vld [vmem:[%s3 + $0x100] sm:$0xff]
      %v479 = vld [vmem:[%s3 + $0x108] sm:$0xff]
      %v480 = vld [vmem:[%s3 + $0x110] sm:$0xff]
      %v481 = vld [vmem:[%s3 + $0x118] sm:$0xff]
      %v482 = vld [vmem:[%s3 + $0x120] sm:$0xff]
      %v483 = vld [vmem:[%s3 + $0x128] sm:$0xff]
      %v484 = vld [vmem:[%s3 + $0x130] sm:$0xff]
      %v485 = vld [vmem:[%s3 + $0x138] sm:$0xff]
      %v486 = vld [vmem:[%s3 + $0x140] sm:$0xff]
      %v487 = vld [vmem:[%s3 + $0x148] sm:$0xff]
      %v488 = vld [vmem:[%s3 + $0x150] sm:$0xff]
      %v489 = vld [vmem:[%s3 + $0x158] sm:$0xff]
      %v490 = vld [vmem:[%s3 + $0x160] sm:$0xff]
      %v491 = vld [vmem:[%s3 + $0x168] sm:$0xff]
      %v492 = vld [vmem:[%s3 + $0x170] sm:$0xff]
      %v493 = vld [vmem:[%s3 + $0x178] sm:$0xff]
      %v494 = vld [vmem:[%s3 + $0x180] sm:$0xff]
      %v495 = vld [vmem:[%s3 + $0x188] sm:$0xff]
      %v496 = vld [vmem:[%s3 + $0x190] sm:$0xff]
      %v497 = vld [vmem:[%s3 + $0x198] sm:$0xff]
      %v498 = vld [vmem:[%s3 + $0x1a0] sm:$0xff]
      %v499 = vld [vmem:[%s3 + $0x1a8] sm:$0xff]
      %v500 = vld [vmem:[%s3 + $0x1b0] sm:$0xff]
      %v501 = vld [vmem:[%s3 + $0x1b8] sm:$0xff]
      %v502 = vld [vmem:[%s3 + $0x1c0] sm:$0xff]
      %v503 = vld [vmem:[%s3 + $0x1c8] sm:$0xff]
      %v504 = vld [vmem:[%s3 + $0x1d0] sm:$0xff]
      %v505 = vld [vmem:[%s3 + $0x1d8] sm:$0xff]
      %v506 = vld [vmem:[%s3 + $0x1e0] sm:$0xff]
      %v507 = vld [vmem:[%s3 + $0x1e8] sm:$0xff]
      %v508 = vld [vmem:[%s3 + $0x1f0] sm:$0xff]
      %v509 = vld [vmem:[%s3 + $0x1f8] sm:$0xff]
      %v510 = vld [vmem:[%s4] sm:$0x3]
      %v512 = vlaneseq
      %v513 = vshrl.u32 %v512, 7
      %v514 = vsub.s32 0, %v513
      %v515 = vrot.slane %v510, %v514
      %v516 = vlaneseq
      %v517 = vshrl.u32 %v516, 7
      %v518 = vsub.s32 1, %v517
      %v519 = vrot.slane %v510, %v518
      %522 = vmatprep.subr.mxu0 %v447
      %523 = vmatpush1.msra.mxu0 %v446
      %524 = vmatprep.subr.mxu0 %v449
      %525 = vmatpush1.msra.mxu0 %v448
      %526 = vmatprep.subr.mxu0 %v451
      %527 = vmatpush1.msra.mxu0 %v450
      %528 = vmatprep.subr.mxu0 %v453
      %529 = vmatpush1.msra.mxu0 %v452
      %530 = vmatprep.subr.mxu0 %v455
      %531 = vmatpush1.msra.mxu0 %v454
      %532 = vmatprep.subr.mxu0 %v457
      %533 = vmatpush1.msra.mxu0 %v456
      %534 = vmatprep.subr.mxu0 %v459
      %535 = vmatpush1.msra.mxu0 %v458
      %536 = vmatprep.subr.mxu0 %v461
      %537 = vmatpush1.msra.mxu0 %v460
      %538 = vmatprep.subr.mxu0 %v463
      %539 = vmatpush1.msra.mxu0 %v462
      %540 = vmatprep.subr.mxu0 %v465
      %541 = vmatpush1.msra.mxu0 %v464
      %542 = vmatprep.subr.mxu0 %v467
      %543 = vmatpush1.msra.mxu0 %v466
      %544 = vmatprep.subr.mxu0 %v469
      %545 = vmatpush1.msra.mxu0 %v468
      %546 = vmatprep.subr.mxu0 %v471
      %547 = vmatpush1.msra.mxu0 %v470
      %548 = vmatprep.subr.mxu0 %v473
      %549 = vmatpush1.msra.mxu0 %v472
      %550 = vmatprep.subr.mxu0 %v475
      %551 = vmatpush1.msra.mxu0 %v474
      %552 = vmatprep.subr.mxu0 %v477
      %553 = vmatpush1.msra.mxu0 %v476
      %554 = vmatprep.subr.mxu0 %v479
      %555 = vmatpush1.msra.mxu0 %v478
      %556 = vmatprep.subr.mxu0 %v481
      %557 = vmatpush1.msra.mxu0 %v480
      %558 = vmatprep.subr.mxu0 %v483
      %559 = vmatpush1.msra.mxu0 %v482
      %560 = vmatprep.subr.mxu0 %v485
      %561 = vmatpush1.msra.mxu0 %v484
      %562 = vmatprep.subr.mxu0 %v487
      %563 = vmatpush1.msra.mxu0 %v486
      %564 = vmatprep.subr.mxu0 %v489
      %565 = vmatpush1.msra.mxu0 %v488
      %566 = vmatprep.subr.mxu0 %v491
      %567 = vmatpush1.msra.mxu0 %v490
      %568 = vmatprep.subr.mxu0 %v493
      %569 = vmatpush1.msra.mxu0 %v492
      %570 = vmatprep.subr.mxu0 %v495
      %571 = vmatpush1.msra.mxu0 %v494
      %572 = vmatprep.subr.mxu0 %v497
      %573 = vmatpush1.msra.mxu0 %v496
      %574 = vmatprep.subr.mxu0 %v499
      %575 = vmatpush1.msra.mxu0 %v498
      %576 = vmatprep.subr.mxu0 %v501
      %577 = vmatpush1.msra.mxu0 %v500
      %578 = vmatprep.subr.mxu0 %v503
      %579 = vmatpush1.msra.mxu0 %v502
      %580 = vmatprep.subr.mxu0 %v505
      %581 = vmatpush1.msra.mxu0 %v504
      %582 = vmatprep.subr.mxu0 %v507
      %583 = vmatpush1.msra.mxu0 %v506
      %584 = vmatprep.subr.mxu0 %v509
      %585 = vmatpush1.msra.mxu0 %v508
      %586 = vmatprep.mubr.f32.mxu0 %v443
      %587 = vmatmul.mubr.f32.gmra.mrb[0].mxu0 %v442
      %v588 = vpop.f32.mrb[0].mxu0
      %v589 = vadd.f32 %v515, %v588
      %v590 = vpop.f32.mrb[0].mxu0
      %v591 = vadd.f32 %v519, %v590
      %592 = vmatprep.mubr.f32.mxu0 %v445
      %593 = vmatmul.mubr.f32.gmra.mrb[0].mxu0 %v444
      %v594 = vpop.f32.mrb[0].mxu0
      %v595 = vadd.f32 %v515, %v594
      %v596 = vpop.f32.mrb[0].mxu0
      %v597 = vadd.f32 %v519, %v596
      %598 = vdwg.mxu0
      %v599 = vmax.f32 %v589, 0.0
      %v600 = vmax.f32 %v591, 0.0
      %v601 = vmax.f32 %v595, 0.0
      %v602 = vmax.f32 %v597, 0.0
      %v603 = vld [vmem:[%s5] sm:$0xff]
      %v604 = vld [vmem:[%s5 + $0x8] sm:$0xff]
      %v605 = vld [vmem:[%s5 + $0x10] sm:$0xff]
      %v606 = vld [vmem:[%s5 + $0x18] sm:$0xff]
      %v607 = vld [vmem:[%s5 + $0x20] sm:$0xff]
      %v608 = vld [vmem:[%s5 + $0x28] sm:$0xff]
      %v609 = vld [vmem:[%s5 + $0x30] sm:$0xff]
      %v610 = vld [vmem:[%s5 + $0x38] sm:$0xff]
      %v611 = vld [vmem:[%s5 + $0x40] sm:$0xff]
      %v612 = vld [vmem:[%s5 + $0x48] sm:$0xff]
      %v613 = vld [vmem:[%s5 + $0x50] sm:$0xff]
      %v614 = vld [vmem:[%s5 + $0x58] sm:$0xff]
      %v615 = vld [vmem:[%s5 + $0x60] sm:$0xff]
      %v616 = vld [vmem:[%s5 + $0x68] sm:$0xff]
      %v617 = vld [vmem:[%s5 + $0x70] sm:$0xff]
      %v618 = vld [vmem:[%s5 + $0x78] sm:$0xff]
      %v619 = vld [vmem:[%s5 + $0x80] sm:$0xff]
      %v620 = vld [vmem:[%s5 + $0x88] sm:$0xff]
      %v621 = vld [vmem:[%s5 + $0x90] sm:$0xff]
      %v622 = vld [vmem:[%s5 + $0x98] sm:$0xff]
      %v623 = vld [vmem:[%s5 + $0xa0] sm:$0xff]
      %v624 = vld [vmem:[%s5 + $0xa8] sm:$0xff]
      %v625 = vld [vmem:[%s5 + $0xb0] sm:$0xff]
      %v626 = vld [vmem:[%s5 + $0xb8] sm:$0xff]
      %v627 = vld [vmem:[%s5 + $0xc0] sm:$0xff]
      %v628 = vld [vmem:[%s5 + $0xc8] sm:$0xff]
      %v629 = vld [vmem:[%s5 + $0xd0] sm:$0xff]
      %v630 = vld [vmem:[%s5 + $0xd8] sm:$0xff]
      %v631 = vld [vmem:[%s5 + $0xe0] sm:$0xff]
      %v632 = vld [vmem:[%s5 + $0xe8] sm:$0xff]
      %v633 = vld [vmem:[%s5 + $0xf0] sm:$0xff]
      %v634 = vld [vmem:[%s5 + $0xf8] sm:$0xff]
      %v635 = vld [vmem:[%s6] sm:$0x1]
      %v637 = vlaneseq
      %v638 = vshrl.u32 %v637, 7
      %v639 = vsub.s32 0, %v638
      %v640 = vrot.slane %v635, %v639
      %642 = vmatprep.subr.mxu0 0.0
      %643 = vmatpush1.msra.mxu0 %v603
      %644 = vmatprep.subr.mxu0 0.0
      %645 = vmatpush1.msra.mxu0 %v604
      %646 = vmatprep.subr.mxu0 0.0
      %647 = vmatpush1.msra.mxu0 %v605
      %648 = vmatprep.subr.mxu0 0.0
      %649 = vmatpush1.msra.mxu0 %v606
      %650 = vmatprep.subr.mxu0 0.0
      %651 = vmatpush1.msra.mxu0 %v607
      %652 = vmatprep.subr.mxu0 0.0
      %653 = vmatpush1.msra.mxu0 %v608
      %654 = vmatprep.subr.mxu0 0.0
      %655 = vmatpush1.msra.mxu0 %v609
      %656 = vmatprep.subr.mxu0 0.0
      %657 = vmatpush1.msra.mxu0 %v610
      %658 = vmatprep.subr.mxu0 0.0
      %659 = vmatpush1.msra.mxu0 %v611
      %660 = vmatprep.subr.mxu0 0.0
      %661 = vmatpush1.msra.mxu0 %v612
      %662 = vmatprep.subr.mxu0 0.0
      %663 = vmatpush1.msra.mxu0 %v613
      %664 = vmatprep.subr.mxu0 0.0
      %665 = vmatpush1.msra.mxu0 %v614
      %666 = vmatprep.subr.mxu0 0.0
      %667 = vmatpush1.msra.mxu0 %v615
      %668 = vmatprep.subr.mxu0 0.0
      %669 = vmatpush1.msra.mxu0 %v616
      %670 = vmatprep.subr.mxu0 0.0
      %671 = vmatpush1.msra.mxu0 %v617
      %672 = vmatprep.subr.mxu0 0.0
      %673 = vmatpush1.msra.mxu0 %v618
      %674 = vmatprep.subr.mxu0 0.0
      %675 = vmatpush1.msra.mxu0 %v619
      %676 = vmatprep.subr.mxu0 0.0
      %677 = vmatpush1.msra.mxu0 %v620
      %678 = vmatprep.subr.mxu0 0.0
      %679 = vmatpush1.msra.mxu0 %v621
      %680 = vmatprep.subr.mxu0 0.0
      %681 = vmatpush1.msra.mxu0 %v622
      %682 = vmatprep.subr.mxu0 0.0
      %683 = vmatpush1.msra.mxu0 %v623
      %684 = vmatprep.subr.mxu0 0.0
      %685 = vmatpush1.msra.mxu0 %v624
      %686 = vmatprep.subr.mxu0 0.0
      %687 = vmatpush1.msra.mxu0 %v625
      %688 = vmatprep.subr.mxu0 0.0
      %689 = vmatpush1.msra.mxu0 %v626
      %690 = vmatprep.subr.mxu0 0.0
      %691 = vmatpush1.msra.mxu0 %v627
      %692 = vmatprep.subr.mxu0 0.0
      %693 = vmatpush1.msra.mxu0 %v628
      %694 = vmatprep.subr.mxu0 0.0
      %695 = vmatpush1.msra.mxu0 %v629
      %696 = vmatprep.subr.mxu0 0.0
      %697 = vmatpush1.msra.mxu0 %v630
      %698 = vmatprep.subr.mxu0 0.0
      %699 = vmatpush1.msra.mxu0 %v631
      %700 = vmatprep.subr.mxu0 0.0
      %701 = vmatpush1.msra.mxu0 %v632
      %702 = vmatprep.subr.mxu0 0.0
      %703 = vmatpush1.msra.mxu0 %v633
      %704 = vmatprep.subr.mxu0 0.0
      %705 = vmatpush1.msra.mxu0 %v634
      %706 = vmatprep.mubr.f32.mxu0 %v600
      %707 = vmatmul.mubr.f32.gmra.mrb[0].mxu0 %v599
      %v708 = vpop.f32.mrb[0].mxu0
      %v709 = vadd.f32 %v640, %v708
      %v710 = vpop.f32.mrb[0].mxu0
      %711 = vmatprep.mubr.f32.mxu0 %v602
      %712 = vmatmul.mubr.f32.gmra.mrb[0].mxu0 %v601
      %v713 = vpop.f32.mrb[0].mxu0
      %v714 = vadd.f32 %v640, %v713
      %v715 = vpop.f32.mrb[0].mxu0
      %716 = vdwg.mxu0
      %vm717 = vcmask 64512
      %718 = vst.msk [vmem:[%s283] sm:$0xff] %vm717, %v709
      %719 = vst.msk [vmem:[%s283 + $0x8] sm:$0xff] %vm717, %v714
      %s720 = smul.u32 2, %s18
      %p721 = scmp.lt.s32.totalorder %s720, 5
      %s722 = scalar_select %p721, %s720, 5
      %s723 = smul.addr %s722, 8
      %s724 = scalar_lea.vmem %s7, %s723
      // Predicated region
      $region49: #{jppnet_forward.1} parent=47 // pred_check
        %p725 = pneg %p188
      $region50: #{jppnet_forward.1} parent=47 // pred_check_branch
        %727 = sbr.rel (%p725) target = $region52
      $region51: #{jppnet_forward.1} parent=47 // pred_region
        %s728 = smul.u32 2, %s18
      $region52: #{jppnet_forward.1} parent=47 // pred_fallthru
        _
    $region48: #{jppnet_forward.1} parent=5 // pred_fallthru
      _
    %p729 = scmp.le.s32.totalorder 2, %s13
    // Predicated region
    $region53: #{jppnet_forward.1} parent=5 // pred_check
      %p730 = pneg %p729
    $region54: #{jppnet_forward.1} parent=5 // pred_check_branch
      %732 = sbr.rel (%p730) target = $region56
    $region55: #{jppnet_forward.1} parent=5 // pred_region
      %s733 = ssub.s32 %s13, 2
      // Predicated region
      $region57: #{jppnet_forward.1} parent=55 // pred_check
        %p734 = pneg %p194
      $region58: #{jppnet_forward.1} parent=55 // pred_check_branch
        %736 = sbr.rel (%p734) target = $region60
      $region59: #{jppnet_forward.1} parent=55 // pred_region
        %s737 = smul.u32 2, %s19
        %p738 = scmp.lt.s32.totalorder %s737, 5
        %s739 = scalar_select %p738, %s737, 5
        %s740 = smul.addr %s739, 8
        %s741 = scalar_lea.vmem %s7, %s740
      $region60: #{jppnet_forward.1} parent=55 // pred_fallthru
        _
    $region56: #{jppnet_forward.1} parent=5 // pred_fallthru
      _
  $region6: #{jppnet_forward.1} parent=0 // loop_footer
    %s17 = sadd.s32 1, %s13
  $region7: #{jppnet_forward.1} parent=0 // loop_footer_branch
    %12 = sbr.rel target = $region3
  $region8: #{jppnet_forward.1} parent=0 // loop_exit
    _

</llo_original>
